<compile_context>
chip_gen: v7x
topology: tpu7x:2x2x1
jax: 0.10.0
libtpu: 0.0.40
codegen_flags: <defaults>
</compile_context>

<pallas_src>
import functools

import jax
import jax.numpy as jnp
from jax import lax
from jax.experimental import pallas as pl
from jax.experimental.pallas import tpu as pltpu


def _generator_kernel(*refs, negative_slope, final_act, transpose_out):
    """Fused MLP, batch-on-lanes intermediates.

    refs = (x_ref, w0, b0, w1, b1, ..., o_ref)
      x_ref : [tile_b, noise]        (native nn.Linear layout, streamed)
      wL    : [out_feat, in_feat]    (torch layout, resident)
      bL    : [out_feat, 1]          (f32, resident)
      o_ref : [out_feat, tile_b]  or [tile_b, out_feat] if transpose_out
    """
    x_ref, *wb_refs, o_ref = refs
    n_linear = len(wb_refs) // 2

    def hidden_act(h):
        if negative_slope == 0.0:
            return jnp.maximum(h, 0.0)                      # ReLU
        return jnp.where(h >= 0.0, h, negative_slope * h)   # LeakyReLU(0.2)

    # First layer: contract the trailing noise axis of BOTH operands so the
    # batch lands on the lane axis without any HBM-side transpose of x.
    x = x_ref[...]
    w0_ref, b0_ref = wb_refs[0], wb_refs[1]
    if w0_ref.dtype != x.dtype:
        x = x.astype(w0_ref.dtype)            # narrow MXU operand in VMEM only
    h = lax.dot_general(w0_ref[...], x,
                        dimension_numbers=(((1,), (1,)), ((), ())),
                        preferred_element_type=jnp.float32)  # [h0, tile_b]
    h = hidden_act(h + b0_ref[...])

    for l in range(1, n_linear):
        w_ref, b_ref = wb_refs[2 * l], wb_refs[2 * l + 1]
        hm = h.astype(w_ref.dtype) if w_ref.dtype != h.dtype else h
        h = jnp.dot(w_ref[...], hm, preferred_element_type=jnp.float32)
        h = h + b_ref[...]
        if l < n_linear - 1:
            h = hidden_act(h)

    if final_act == "tanh":
        h = jnp.tanh(h)                                      # EUP
    else:  # "sigmoid": exp and approx reciprocal both land on the EUP slot
        h = pl.reciprocal(1.0 + jnp.exp(-h), approx=True)

    o_ref[...] = (h.T if transpose_out else h).astype(o_ref.dtype)


def generator_forward(x, params, *, negative_slope=0.0, final_act="tanh",
                      tile_b=4096, matmul_dtype=None, out_dtype=jnp.float32,
                      out_layout="NB"):
    """x: [B, noise_size]; params: flat (W0,b0,W1,b1,...) with W as [in,out], b as [1,out].

    matmul_dtype : None (f32 MXU) or jnp.bfloat16 (bf16 MXU operands; safe on
                   v5e/v6e/v7x; f32 accumulation and f32 elementwise math).
    out_layout   : "NB" -> returns [out_f, B] batch-on-lanes (fast path, let the
                   discriminator consume this layout); "BN" -> [B, out_f] via an
                   in-kernel transpose (no wrapper HBM transpose pass).
    """
    assert final_act in ("tanh", "sigmoid")
    assert out_layout in ("NB", "BN")
    B, noise = x.shape
    n_linear = len(params) // 2

    # Tiny resident operands: transpose weights to torch-native [out,in] and
    # reshape biases to [out,1] (negligible), cast ONLY the weights to bf16.
    w_list, b_list = [], []
    for l in range(n_linear):
        w = params[2 * l].T                                  # [out_feat, in_feat]
        b = params[2 * l + 1].reshape(-1, 1)                 # [out_feat, 1]  (f32)
        if matmul_dtype is not None:
            w = w.astype(matmul_dtype)
        w_list.append(w)
        b_list.append(b)
    out_f = w_list[-1].shape[0]

    # Batch tile: 128-multiple, as large as the batch allows (default 4096);
    # on big batches cap it so the grid has >=2 steps for v7x megacore sharding.
    Bp128 = pl.cdiv(B, 128) * 128
    tile = max(128, (min(int(tile_b), Bp128) // 128) * 128)
    if Bp128 >= 2048 and tile >= Bp128:
        tile = max(128, ((Bp128 // 2) // 128) * 128)
    grid = pl.cdiv(B, tile)   # ragged last tile: Pallas masks the partial block

    kernel = functools.partial(_generator_kernel,
                               negative_slope=negative_slope,
                               final_act=final_act,
                               transpose_out=(out_layout == "BN"))

    full = lambda arr: pl.BlockSpec(arr.shape, lambda i: (0, 0))
    in_specs = [pl.BlockSpec((tile, noise), lambda i: (i, 0))]
    args = [x]
    for w, b in zip(w_list, b_list):
        in_specs += [full(w), full(b)]
        args += [w, b]

    if out_layout == "NB":
        out_shape = jax.ShapeDtypeStruct((out_f, B), out_dtype)
        out_spec = pl.BlockSpec((out_f, tile), lambda i: (0, i))
    else:
        out_shape = jax.ShapeDtypeStruct((B, out_f), out_dtype)
        out_spec = pl.BlockSpec((tile, out_f), lambda i: (i, 0))

    sizes = [params[2 * l].shape for l in range(n_linear)]   # (in, out) per layer
    flops = 2 * B * sum(i * o for i, o in sizes)
    transc = B * out_f * (1 if final_act == "tanh" else 2)
    bytes_accessed = (x.size * x.dtype.itemsize
                      + B * out_f * jnp.dtype(out_dtype).itemsize
                      + sum(int(a.size) * a.dtype.itemsize
                            for a in (w_list + b_list)))
    cost = pl.CostEstimate(flops=flops, transcendentals=transc,
                           bytes_accessed=bytes_accessed)

    return pl.pallas_call(
        kernel,
        out_shape=out_shape,
        grid_spec=pltpu.PrefetchScalarGridSpec(
            num_scalar_prefetch=0,
            grid=(grid,),
            in_specs=in_specs,
            out_specs=out_spec,
        ),
        compiler_params=pltpu.CompilerParams(
            dimension_semantics=("parallel",)),
        cost_estimate=cost,
    )(*args)


def init_generator_params(key, noise_size, hidden_layers, output_size):
    """Deterministic PyTorch-style Linear init (U[-1/sqrt(fan_in), 1/sqrt(fan_in)]).

    Weights stored as [in, out] with biases [1, out]; the wrapper transposes
    the tiny weights to torch-native [out, in] for the kernel, so
    y = x @ W + b matches nn.Linear semantics exactly."""
    sizes = [noise_size] + list(hidden_layers) + [output_size]
    params = []
    for fan_in, fan_out in zip(sizes[:-1], sizes[1:]):
        key, kw, kb = jax.random.split(key, 3)
        bound = 1.0 / jnp.sqrt(fan_in)
        w = jax.random.uniform(kw, (fan_in, fan_out), jnp.float32, -bound, bound)
        b = jax.random.uniform(kb, (1, fan_out), jnp.float32, -bound, bound)
        params += [w, b]
    return tuple(params)


def _reference_forward(x, params, negative_slope=0.0, final_act="tanh"):
    act = (lambda h: jnp.maximum(h, 0.0)) if negative_slope == 0.0 else \
          (lambda h: jnp.where(h >= 0.0, h, negative_slope * h))
    n = len(params) // 2
    h = x
    for l in range(n):
        h = h @ params[2 * l] + params[2 * l + 1]
        if l < n - 1:
            h = act(h)
    return jnp.tanh(h) if final_act == "tanh" else jax.nn.sigmoid(h)


if __name__ == "__main__":
    key = jax.random.PRNGKey(0)
    k_x, k_p = jax.random.split(key)
    noise_size, hidden_layers, output_size = 32, [64, 32], 16

    params = init_generator_params(k_p, noise_size, hidden_layers, output_size)

    # 1) f32 path, ReLU hidden / Tanh output, batch-on-lanes output (fast path).
    #    tile_b=128 -> grid of 2 batch tiles (exercises multi-step grid /
    #    v7x megacore sharding).
    batch = 256
    x = jax.random.normal(k_x, (batch, noise_size), jnp.float32)
    out = generator_forward(x, params, negative_slope=0.0, final_act="tanh",
                            tile_b=128, out_layout="NB")
    out = jax.block_until_ready(out)
    ref = _reference_forward(x, params, 0.0, "tanh")
    assert out.shape == (output_size, batch)
    assert jnp.allclose(out.T, ref, atol=1e-5, rtol=1e-5)

    # 2) Ragged batch (Pallas masks the partial tile; no host-side pad),
    #    bf16 MXU weights (fine on v5e/v6e/v7x), LeakyReLU(0.2)/Sigmoid,
    #    [B, out_f] layout via in-kernel transpose (no wrapper .T HBM pass).
    x2 = jax.random.normal(k_x, (200, noise_size), jnp.float32)
    out2 = generator_forward(x2, params, negative_slope=0.2, final_act="sigmoid",
                             matmul_dtype=jnp.bfloat16, out_layout="BN")
    out2 = jax.block_until_ready(out2)
    ref2 = _reference_forward(x2, params, 0.2, "sigmoid")
    assert out2.shape == (200, output_size)
    assert jnp.allclose(out2, ref2, atol=5e-2, rtol=5e-2)

    print("KERNEL_OK")
</pallas_src>

<mosaic_0001>
module attributes {stable_mosaic.version = 11 : i64} {
  func.func @_generator_kernel(%arg0: i32, %arg1: memref<128x32xf32, #tpu.memory_space<vmem>>, %arg2: memref<64x32xf32, #tpu.memory_space<vmem>>, %arg3: memref<64x1xf32, #tpu.memory_space<vmem>>, %arg4: memref<32x64xf32, #tpu.memory_space<vmem>>, %arg5: memref<32x1xf32, #tpu.memory_space<vmem>>, %arg6: memref<16x32xf32, #tpu.memory_space<vmem>>, %arg7: memref<16x1xf32, #tpu.memory_space<vmem>>, %arg8: memref<16x128xf32, #tpu.memory_space<vmem>>) attributes {dimension_semantics = [#tpu.dimension_semantics<parallel>], iteration_bounds = array<i64: 2>, scalar_prefetch = 0 : i64, scratch_operands = 0 : i64, tpu.core_type = #tpu.core_type<tc>, window_params = [{transform_indices = @transform_0, window_bounds = array<i64: 128, 32>}, {pipeline_mode = #tpu.pipeline_mode<synchronous>, transform_indices = @transform_1, window_bounds = array<i64: 64, 32>}, {pipeline_mode = #tpu.pipeline_mode<synchronous>, transform_indices = @transform_2, window_bounds = array<i64: 64, 1>}, {pipeline_mode = #tpu.pipeline_mode<synchronous>, transform_indices = @transform_3, window_bounds = array<i64: 32, 64>}, {pipeline_mode = #tpu.pipeline_mode<synchronous>, transform_indices = @transform_4, window_bounds = array<i64: 32, 1>}, {pipeline_mode = #tpu.pipeline_mode<synchronous>, transform_indices = @transform_5, window_bounds = array<i64: 16, 32>}, {pipeline_mode = #tpu.pipeline_mode<synchronous>, transform_indices = @transform_6, window_bounds = array<i64: 16, 1>}, {transform_indices = @transform_7, window_bounds = array<i64: 16, 128>}]} {
    %c0 = arith.constant 0 : index
    %c0_0 = arith.constant 0 : index
    %0 = vector.load %arg1[%c0, %c0_0] : memref<128x32xf32, #tpu.memory_space<vmem>>, vector<128x32xf32>
    %c0_1 = arith.constant 0 : index
    %c0_2 = arith.constant 0 : index
    %1 = vector.load %arg2[%c0_1, %c0_2] : memref<64x32xf32, #tpu.memory_space<vmem>>, vector<64x32xf32>
    %cst = arith.constant dense<0.000000e+00> : vector<64x128xf32>
    %2 = tpu.matmul %1, %0, %cst {dimension_numbers = #tpu.dot_dimension_numbers<[1], [1], [0], [0], [0, 0, 1, 0], [], []>} : vector<64x32xf32>, vector<128x32xf32>, vector<64x128xf32> -> vector<64x128xf32>
    %c0_3 = arith.constant 0 : index
    %c0_4 = arith.constant 0 : index
    %3 = vector.load %arg3[%c0_3, %c0_4] : memref<64x1xf32, #tpu.memory_space<vmem>>, vector<64x1xf32>
    %4 = vector.broadcast %3 : vector<64x1xf32> to vector<64x128xf32>
    %5 = arith.addf %2, %4 : vector<64x128xf32>
    %cst_5 = arith.constant 0.000000e+00 : f32
    %6 = vector.broadcast %cst_5 : f32 to vector<64x128xf32>
    %7 = arith.maximumf %5, %6 : vector<64x128xf32>
    %c0_6 = arith.constant 0 : index
    %c0_7 = arith.constant 0 : index
    %8 = vector.load %arg4[%c0_6, %c0_7] : memref<32x64xf32, #tpu.memory_space<vmem>>, vector<32x64xf32>
    %cst_8 = arith.constant dense<0.000000e+00> : vector<32x128xf32>
    %9 = tpu.matmul %8, %7, %cst_8 {dimension_numbers = #tpu.dot_dimension_numbers<[1], [0], [0], [1], [0, 0, 1, 1], [], []>} : vector<32x64xf32>, vector<64x128xf32>, vector<32x128xf32> -> vector<32x128xf32>
    %c0_9 = arith.constant 0 : index
    %c0_10 = arith.constant 0 : index
    %10 = vector.load %arg5[%c0_9, %c0_10] : memref<32x1xf32, #tpu.memory_space<vmem>>, vector<32x1xf32>
    %11 = vector.broadcast %10 : vector<32x1xf32> to vector<32x128xf32>
    %12 = arith.addf %9, %11 : vector<32x128xf32>
    %cst_11 = arith.constant 0.000000e+00 : f32
    %13 = vector.broadcast %cst_11 : f32 to vector<32x128xf32>
    %14 = arith.maximumf %12, %13 : vector<32x128xf32>
    %c0_12 = arith.constant 0 : index
    %c0_13 = arith.constant 0 : index
    %15 = vector.load %arg6[%c0_12, %c0_13] : memref<16x32xf32, #tpu.memory_space<vmem>>, vector<16x32xf32>
    %cst_14 = arith.constant dense<0.000000e+00> : vector<16x128xf32>
    %16 = tpu.matmul %15, %14, %cst_14 {dimension_numbers = #tpu.dot_dimension_numbers<[1], [0], [0], [1], [0, 0, 1, 1], [], []>} : vector<16x32xf32>, vector<32x128xf32>, vector<16x128xf32> -> vector<16x128xf32>
    %c0_15 = arith.constant 0 : index
    %c0_16 = arith.constant 0 : index
    %17 = vector.load %arg7[%c0_15, %c0_16] : memref<16x1xf32, #tpu.memory_space<vmem>>, vector<16x1xf32>
    %18 = vector.broadcast %17 : vector<16x1xf32> to vector<16x128xf32>
    %19 = arith.addf %16, %18 : vector<16x128xf32>
    %20 = math.tanh %19 : vector<16x128xf32>
    %c0_17 = arith.constant 0 : index
    %c0_18 = arith.constant 0 : index
    %21 = vector.load %arg8[%c0_17, %c0_18] : memref<16x128xf32, #tpu.memory_space<vmem>>, vector<16x128xf32>
    tpu.vector_store %arg8[%c0_17, %c0_18], %20 {strides = array<i32>} : memref<16x128xf32, #tpu.memory_space<vmem>>, vector<16x128xf32>,
    return
  }
  func.func @transform_0(%arg0: i32) -> (i32, i32) {
    %c0_i32 = arith.constant 0 : i32
    %c0_i32_0 = arith.constant 0 : i32
    return %arg0, %c0_i32 : i32, i32
  }
  func.func @transform_1(%arg0: i32) -> (i32, i32) {
    %c0_i32 = arith.constant 0 : i32
    %c0_i32_0 = arith.constant 0 : i32
    %c0_i32_1 = arith.constant 0 : i32
    return %c0_i32, %c0_i32_0 : i32, i32
  }
  func.func @transform_2(%arg0: i32) -> (i32, i32) {
    %c0_i32 = arith.constant 0 : i32
    %c0_i32_0 = arith.constant 0 : i32
    %c0_i32_1 = arith.constant 0 : i32
    return %c0_i32, %c0_i32_0 : i32, i32
  }
  func.func @transform_3(%arg0: i32) -> (i32, i32) {
    %c0_i32 = arith.constant 0 : i32
    %c0_i32_0 = arith.constant 0 : i32
    %c0_i32_1 = arith.constant 0 : i32
    return %c0_i32, %c0_i32_0 : i32, i32
  }
  func.func @transform_4(%arg0: i32) -> (i32, i32) {
    %c0_i32 = arith.constant 0 : i32
    %c0_i32_0 = arith.constant 0 : i32
    %c0_i32_1 = arith.constant 0 : i32
    return %c0_i32, %c0_i32_0 : i32, i32
  }
  func.func @transform_5(%arg0: i32) -> (i32, i32) {
    %c0_i32 = arith.constant 0 : i32
    %c0_i32_0 = arith.constant 0 : i32
    %c0_i32_1 = arith.constant 0 : i32
    return %c0_i32, %c0_i32_0 : i32, i32
  }
  func.func @transform_6(%arg0: i32) -> (i32, i32) {
    %c0_i32 = arith.constant 0 : i32
    %c0_i32_0 = arith.constant 0 : i32
    %c0_i32_1 = arith.constant 0 : i32
    return %c0_i32, %c0_i32_0 : i32, i32
  }
  func.func @transform_7(%arg0: i32) -> (i32, i32) {
    %c0_i32 = arith.constant 0 : i32
    %c0_i32_0 = arith.constant 0 : i32
    return %c0_i32, %arg0 : i32, i32
  }
}

</mosaic_0001>

<llo_original>
// kernel: tpu_custom_call.1
$region0: #{tpu_custom_call.1}
  #allocation0 [shape = 'u32[]', space=smem, size = 0x4, offset = 0x4, fixed_abs, tag = 'smem constant byte address 0x4 - core index']
  #allocation1 [shape = 'u32[144,128]{1,0:T(1,128)}', space=vmem, size = 0x12000, scoped, tag = 'internal scratch']
  %s0 = inlined_call_operand.vmem [shape: f32[256,32], index: 0, kind: input, shape index: {}]
  %s1 = inlined_call_operand.vmem [shape: f32[64,32], index: 1, kind: input, shape index: {}]
  %s2 = inlined_call_operand.vmem [shape: f32[64,1], index: 2, kind: input, shape index: {}]
  %s3 = inlined_call_operand.vmem [shape: f32[32,64], index: 3, kind: input, shape index: {}]
  %s4 = inlined_call_operand.vmem [shape: f32[32,1], index: 4, kind: input, shape index: {}]
  %s5 = inlined_call_operand.vmem [shape: f32[16,32], index: 5, kind: input, shape index: {}]
  %s6 = inlined_call_operand.vmem [shape: f32[16,1], index: 6, kind: input, shape index: {}]
  %s7 = inlined_call_operand.hbm [shape: f32[16,256], index: 7, kind: output, shape index: {}]
  %s8 = sld [smem:[#allocation0]]
  $region61: #{tpu_custom_call.1} parent=0
    _
  %s10 = ssub.s32 1, %s8
  %s11 = scalar_select 0, %s10, %s8
  $region1: #{tpu_custom_call.1} parent=0
    #allocation2 [shape = 'u8[16384]{0}', space=vmem, size = 0x4000, scoped, tag = 'output window, operand 0']
    #allocation3 [shape = 's32[2]{0}', space=sflag, size = 0x8, scoped, tag = 'scoped memory for tpu_custom_call.1']
    %12 = vsyncpa [#allocation3], 0
    %s13 = scalar_lea.sflag [#allocation3], 1
    %14 = vsyncpa %s13, 0
    loop: start=0, step=1, limit=4
    $region2: #{tpu_custom_call.1} parent=1 // loop_pre_header
      _
    $region3: #{tpu_custom_call.1} parent=1 // loop_header
      %s16 = sphi 0, %s20
      %p17 = scmp.ge.s32.totalorder %s16, 4
      %s26 = sphi 0, %s28
      %s29 = sphi 0, %s26
      %s30 = sphi 0, %s29
      %s46 = sphi 0, %s30
      %s50 = sphi 0, %s50
      %s52 = sphi 0, %s50
      %s53 = sphi 0, %s52
      %s67 = sphi 0, %s53
      %s71 = sphi 0, %s71
      %s73 = sphi 0, %s71
      %s74 = sphi 0, %s73
      %s88 = sphi 0, %s74
      %s92 = sphi 0, %s92
      %s94 = sphi 0, %s92
      %s95 = sphi 0, %s94
      %s109 = sphi 0, %s95
      %s113 = sphi 0, %s113
      %s115 = sphi 0, %s113
      %s116 = sphi 0, %s115
      %s130 = sphi 0, %s116
      %s134 = sphi 0, %s134
      %s136 = sphi 0, %s134
      %s137 = sphi 0, %s136
      %s151 = sphi 0, %s137
      %s155 = sphi 0, %s155
      %s157 = sphi 0, %s155
      %s158 = sphi 0, %s157
      %s172 = sphi 0, %s158
      %s178 = sphi 0, %s180
      %s181 = sphi 0, %s178
      %s182 = sphi 0, %s181
      %s198 = sphi 0, %s182
    $region4: #{tpu_custom_call.1} parent=1 // loop_header_branch
      %19 = sbr.rel (%p17) target = $region8
    $region5: #{tpu_custom_call.1} parent=1 // loop_body
      %s21 = ssub.s32 %s16, 1
      %s22 = ssub.s32 %s16, 2
      %s23 = sadd.s32 %s16, 1
      %s24 = ssub.s32 %s16, %s23
      %p25 = scmp.eq.s32.totalorder %s24, 0
      %s27 = sadd.s32 %s26, 1
      %s28 = scalar_select %p25, %s26, %s27
      %p31 = pneg %p25
      %p32 = scmp.eq.s32.totalorder %s16, 1
      %p33 = por %p31, %p32
      %p34 = scmp.ne.s32.totalorder %s26, %s29
      %p35 = scmp.eq.s32.totalorder %s16, 0
      %p36 = por %p34, %p35
      %p37 = scmp.ne.s32.totalorder %s26, %s29
      %p38 = scmp.eq.s32.totalorder %s21, 1
      %p39 = por %p37, %p38
      %p40 = scmp.ne.s32.totalorder %s29, %s30
      %p41 = scmp.eq.s32.totalorder %s21, 0
      %p42 = por %p40, %p41
      %p43 = scmp.ne.s32.totalorder %s29, %s30
      %p44 = scmp.eq.s32.totalorder %s22, 1
      %p45 = por %p43, %p44
      %p47 = scmp.ne.s32.totalorder %s30, %s46
      %p48 = scmp.eq.s32.totalorder %s22, 0
      %p49 = por %p47, %p48
      %s51 = sadd.s32 %s50, 1
      %p54 = scmp.eq.s32.totalorder %s16, 1
      %p55 = scmp.ne.s32.totalorder %s50, %s52
      %p56 = scmp.eq.s32.totalorder %s16, 0
      %p57 = por %p55, %p56
      %p58 = scmp.ne.s32.totalorder %s50, %s52
      %p59 = scmp.eq.s32.totalorder %s21, 1
      %p60 = por %p58, %p59
      %p61 = scmp.ne.s32.totalorder %s52, %s53
      %p62 = scmp.eq.s32.totalorder %s21, 0
      %p63 = por %p61, %p62
      %p64 = scmp.ne.s32.totalorder %s52, %s53
      %p65 = scmp.eq.s32.totalorder %s22, 1
      %p66 = por %p64, %p65
      %p68 = scmp.ne.s32.totalorder %s53, %s67
      %p69 = scmp.eq.s32.totalorder %s22, 0
      %p70 = por %p68, %p69
      %s72 = sadd.s32 %s71, 1
      %p75 = scmp.eq.s32.totalorder %s16, 1
      %p76 = scmp.ne.s32.totalorder %s71, %s73
      %p77 = scmp.eq.s32.totalorder %s16, 0
      %p78 = por %p76, %p77
      %p79 = scmp.ne.s32.totalorder %s71, %s73
      %p80 = scmp.eq.s32.totalorder %s21, 1
      %p81 = por %p79, %p80
      %p82 = scmp.ne.s32.totalorder %s73, %s74
      %p83 = scmp.eq.s32.totalorder %s21, 0
      %p84 = por %p82, %p83
      %p85 = scmp.ne.s32.totalorder %s73, %s74
      %p86 = scmp.eq.s32.totalorder %s22, 1
      %p87 = por %p85, %p86
      %p89 = scmp.ne.s32.totalorder %s74, %s88
      %p90 = scmp.eq.s32.totalorder %s22, 0
      %p91 = por %p89, %p90
      %s93 = sadd.s32 %s92, 1
      %p96 = scmp.eq.s32.totalorder %s16, 1
      %p97 = scmp.ne.s32.totalorder %s92, %s94
      %p98 = scmp.eq.s32.totalorder %s16, 0
      %p99 = por %p97, %p98
      %p100 = scmp.ne.s32.totalorder %s92, %s94
      %p101 = scmp.eq.s32.totalorder %s21, 1
      %p102 = por %p100, %p101
      %p103 = scmp.ne.s32.totalorder %s94, %s95
      %p104 = scmp.eq.s32.totalorder %s21, 0
      %p105 = por %p103, %p104
      %p106 = scmp.ne.s32.totalorder %s94, %s95
      %p107 = scmp.eq.s32.totalorder %s22, 1
      %p108 = por %p106, %p107
      %p110 = scmp.ne.s32.totalorder %s95, %s109
      %p111 = scmp.eq.s32.totalorder %s22, 0
      %p112 = por %p110, %p111
      %s114 = sadd.s32 %s113, 1
      %p117 = scmp.eq.s32.totalorder %s16, 1
      %p118 = scmp.ne.s32.totalorder %s113, %s115
      %p119 = scmp.eq.s32.totalorder %s16, 0
      %p120 = por %p118, %p119
      %p121 = scmp.ne.s32.totalorder %s113, %s115
      %p122 = scmp.eq.s32.totalorder %s21, 1
      %p123 = por %p121, %p122
      %p124 = scmp.ne.s32.totalorder %s115, %s116
      %p125 = scmp.eq.s32.totalorder %s21, 0
      %p126 = por %p124, %p125
      %p127 = scmp.ne.s32.totalorder %s115, %s116
      %p128 = scmp.eq.s32.totalorder %s22, 1
      %p129 = por %p127, %p128
      %p131 = scmp.ne.s32.totalorder %s116, %s130
      %p132 = scmp.eq.s32.totalorder %s22, 0
      %p133 = por %p131, %p132
      %s135 = sadd.s32 %s134, 1
      %p138 = scmp.eq.s32.totalorder %s16, 1
      %p139 = scmp.ne.s32.totalorder %s134, %s136
      %p140 = scmp.eq.s32.totalorder %s16, 0
      %p141 = por %p139, %p140
      %p142 = scmp.ne.s32.totalorder %s134, %s136
      %p143 = scmp.eq.s32.totalorder %s21, 1
      %p144 = por %p142, %p143
      %p145 = scmp.ne.s32.totalorder %s136, %s137
      %p146 = scmp.eq.s32.totalorder %s21, 0
      %p147 = por %p145, %p146
      %p148 = scmp.ne.s32.totalorder %s136, %s137
      %p149 = scmp.eq.s32.totalorder %s22, 1
      %p150 = por %p148, %p149
      %p152 = scmp.ne.s32.totalorder %s137, %s151
      %p153 = scmp.eq.s32.totalorder %s22, 0
      %p154 = por %p152, %p153
      %s156 = sadd.s32 %s155, 1
      %p159 = scmp.eq.s32.totalorder %s16, 1
      %p160 = scmp.ne.s32.totalorder %s155, %s157
      %p161 = scmp.eq.s32.totalorder %s16, 0
      %p162 = por %p160, %p161
      %p163 = scmp.ne.s32.totalorder %s155, %s157
      %p164 = scmp.eq.s32.totalorder %s21, 1
      %p165 = por %p163, %p164
      %p166 = scmp.ne.s32.totalorder %s157, %s158
      %p167 = scmp.eq.s32.totalorder %s21, 0
      %p168 = por %p166, %p167
      %p169 = scmp.ne.s32.totalorder %s157, %s158
      %p170 = scmp.eq.s32.totalorder %s22, 1
      %p171 = por %p169, %p170
      %p173 = scmp.ne.s32.totalorder %s158, %s172
      %p174 = scmp.eq.s32.totalorder %s22, 0
      %p175 = por %p173, %p174
      %s176 = ssub.s32 %s16, %s23
      %p177 = scmp.eq.s32.totalorder %s176, 0
      %s179 = sadd.s32 %s178, 1
      %s180 = scalar_select %p177, %s178, %s179
      %p183 = pneg %p177
      %p184 = scmp.eq.s32.totalorder %s16, 1
      %p185 = por %p183, %p184
      %p186 = scmp.ne.s32.totalorder %s178, %s181
      %p187 = scmp.eq.s32.totalorder %s16, 0
      %p188 = por %p186, %p187
      %p189 = scmp.ne.s32.totalorder %s178, %s181
      %p190 = scmp.eq.s32.totalorder %s21, 1
      %p191 = por %p189, %p190
      %p192 = scmp.ne.s32.totalorder %s181, %s182
      %p193 = scmp.eq.s32.totalorder %s21, 0
      %p194 = por %p192, %p193
      %p195 = scmp.ne.s32.totalorder %s181, %s182
      %p196 = scmp.eq.s32.totalorder %s22, 1
      %p197 = por %p195, %p196
      %p199 = scmp.ne.s32.totalorder %s182, %s198
      %p200 = scmp.eq.s32.totalorder %s22, 0
      %p201 = por %p199, %p200
      %p202 = scmp.le.s32.totalorder 1, %s16
      %p203 = scmp.lt.s32.totalorder %s16, 3
      %p204 = pnand %p202, %p203
      %p205 = pneg %p204
      // Predicated region
      $region9: #{tpu_custom_call.1} parent=5 // pred_check
        _
      $region10: #{tpu_custom_call.1} parent=5 // pred_check_branch
        %207 = sbr.rel (%p204) target = $region12
      $region11: #{tpu_custom_call.1} parent=5 // pred_region
        %s208 = ssub.s32 %s16, 1
        // Predicated region
        $region13: #{tpu_custom_call.1} parent=11 // pred_check
          %p209 = pneg %p63
        $region14: #{tpu_custom_call.1} parent=11 // pred_check_branch
          %211 = sbr.rel (%p209) target = $region16
        $region15: #{tpu_custom_call.1} parent=11 // pred_region
          _
        $region16: #{tpu_custom_call.1} parent=11 // pred_fallthru
          _
        // Predicated region
        $region17: #{tpu_custom_call.1} parent=11 // pred_check
          %p212 = pneg %p84
        $region18: #{tpu_custom_call.1} parent=11 // pred_check_branch
          %214 = sbr.rel (%p212) target = $region20
        $region19: #{tpu_custom_call.1} parent=11 // pred_region
          _
        $region20: #{tpu_custom_call.1} parent=11 // pred_fallthru
          _
        // Predicated region
        $region21: #{tpu_custom_call.1} parent=11 // pred_check
          %p215 = pneg %p105
        $region22: #{tpu_custom_call.1} parent=11 // pred_check_branch
          %217 = sbr.rel (%p215) target = $region24
        $region23: #{tpu_custom_call.1} parent=11 // pred_region
          _
        $region24: #{tpu_custom_call.1} parent=11 // pred_fallthru
          _
        // Predicated region
        $region25: #{tpu_custom_call.1} parent=11 // pred_check
          %p218 = pneg %p126
        $region26: #{tpu_custom_call.1} parent=11 // pred_check_branch
          %220 = sbr.rel (%p218) target = $region28
        $region27: #{tpu_custom_call.1} parent=11 // pred_region
          _
        $region28: #{tpu_custom_call.1} parent=11 // pred_fallthru
          _
        // Predicated region
        $region29: #{tpu_custom_call.1} parent=11 // pred_check
          %p221 = pneg %p147
        $region30: #{tpu_custom_call.1} parent=11 // pred_check_branch
          %223 = sbr.rel (%p221) target = $region32
        $region31: #{tpu_custom_call.1} parent=11 // pred_region
          _
        $region32: #{tpu_custom_call.1} parent=11 // pred_fallthru
          _
        // Predicated region
        $region33: #{tpu_custom_call.1} parent=11 // pred_check
          %p224 = pneg %p168
        $region34: #{tpu_custom_call.1} parent=11 // pred_check_branch
          %226 = sbr.rel (%p224) target = $region36
        $region35: #{tpu_custom_call.1} parent=11 // pred_region
          _
        $region36: #{tpu_custom_call.1} parent=11 // pred_fallthru
          _
      $region12: #{tpu_custom_call.1} parent=5 // pred_fallthru
        _
      %p227 = scmp.lt.s32.totalorder %s16, 2
      // Predicated region
      $region37: #{tpu_custom_call.1} parent=5 // pred_check
        %p228 = pneg %p227
      $region38: #{tpu_custom_call.1} parent=5 // pred_check_branch
        %230 = sbr.rel (%p228) target = $region40
      $region39: #{tpu_custom_call.1} parent=5 // pred_region
        // Predicated region
        $region41: #{tpu_custom_call.1} parent=39 // pred_check
          %p231 = pneg %p36
        $region42: #{tpu_custom_call.1} parent=39 // pred_check_branch
          %233 = sbr.rel (%p231) target = $region44
        $region43: #{tpu_custom_call.1} parent=39 // pred_region
          %s234 = smul.u32 16, %s16
          %p235 = scmp.lt.s32.totalorder %s234, 31
          %s236 = scalar_select %p235, %s234, 31
          %s237 = smul.addr %s236, 8
          %s238 = scalar_lea.vmem %s0, %s237
          %s239 = smul.u32 16, %s16
        $region44: #{tpu_custom_call.1} parent=39 // pred_fallthru
          _
      $region40: #{tpu_custom_call.1} parent=5 // pred_fallthru
        _
      %p240 = scmp.le.s32.totalorder 1, %s16
      %p241 = scmp.lt.s32.totalorder %s16, 3
      %p242 = pnand %p240, %p241
      %p243 = pneg %p242
      // Predicated region
      $region45: #{tpu_custom_call.1} parent=5 // pred_check
        _
      $region46: #{tpu_custom_call.1} parent=5 // pred_check_branch
        %245 = sbr.rel (%p242) target = $region48
      $region47: #{tpu_custom_call.1} parent=5 // pred_region
        %s246 = ssub.s32 %s16, 1
        %s247 = smul.u32 16, %s21
        %p248 = scmp.lt.s32.totalorder %s247, 31
        %s249 = scalar_select %p248, %s247, 31
        %s250 = smul.addr %s249, 8
        %s251 = scalar_lea.vmem %s0, %s250
        %p252 = pneg %p42
        %p253 = pneg %p39
        %p254 = pneg %p63
        %p255 = pneg %p60
        %p256 = pneg %p84
        %p257 = pneg %p81
        %p258 = pneg %p105
        %p259 = pneg %p102
        %p260 = pneg %p126
        %p261 = pneg %p123
        %p262 = pneg %p147
        %p263 = pneg %p144
        %p264 = pneg %p168
        %p265 = pneg %p165
        %p266 = pneg %p194
        %p267 = pneg %p191
        %s268 = sand.u32 %s181, 1
        %s269 = scalar_lea.sflag [#allocation3], %s268
        %s270 = sand.u32 %s181, 1
        %s271 = smul.addr %s270, 16
        %s272 = scalar_lea.vmem [#allocation2], %s271
        %s273 = smul.u32 16, %s21
        %p274 = scmp.lt.s32.totalorder %s273, 31
        %s275 = scalar_select %p274, %s273, 31
        %s276 = smul.addr %s275, 8
        %s277 = scalar_lea.vmem %s0, %s276
        %s278 = smul.u32 16, %s21
        %v279 = vld [vmem:[%s277] sm:$0xff]
        %v280 = vld [vmem:[%s277 + $0x8] sm:$0xff]
        %v281 = vld [vmem:[%s277 + $0x10] sm:$0xff]
        %v282 = vld [vmem:[%s277 + $0x18] sm:$0xff]
        %v283 = vld [vmem:[%s277 + $0x20] sm:$0xff]
        %v284 = vld [vmem:[%s277 + $0x28] sm:$0xff]
        %v285 = vld [vmem:[%s277 + $0x30] sm:$0xff]
        %v286 = vld [vmem:[%s277 + $0x38] sm:$0xff]
        %v287 = vld [vmem:[%s277 + $0x40] sm:$0xff]
        %v288 = vld [vmem:[%s277 + $0x48] sm:$0xff]
        %v289 = vld [vmem:[%s277 + $0x50] sm:$0xff]
        %v290 = vld [vmem:[%s277 + $0x58] sm:$0xff]
        %v291 = vld [vmem:[%s277 + $0x60] sm:$0xff]
        %v292 = vld [vmem:[%s277 + $0x68] sm:$0xff]
        %v293 = vld [vmem:[%s277 + $0x70] sm:$0xff]
        %v294 = vld [vmem:[%s277 + $0x78] sm:$0xff]
        %v295 = vld [vmem:[%s1] sm:$0xff]
        %v296 = vld [vmem:[%s1 + $0x8] sm:$0xff]
        %v297 = vld [vmem:[%s1 + $0x10] sm:$0xff]
        %v298 = vld [vmem:[%s1 + $0x18] sm:$0xff]
        %v299 = vld [vmem:[%s1 + $0x20] sm:$0xff]
        %v300 = vld [vmem:[%s1 + $0x28] sm:$0xff]
        %v301 = vld [vmem:[%s1 + $0x30] sm:$0xff]
        %v302 = vld [vmem:[%s1 + $0x38] sm:$0xff]
        %v303 = vld [vmem:[%s2] sm:$0xff]
        %v304 = vld [vmem:[%s2 + $0x8] sm:$0xff]
        %v305 = vld [vmem:[%s2 + $0x10] sm:$0xff]
        %v306 = vld [vmem:[%s2 + $0x18] sm:$0xff]
        %v307 = vld [vmem:[%s2 + $0x20] sm:$0xff]
        %v308 = vld [vmem:[%s2 + $0x28] sm:$0xff]
        %v309 = vld [vmem:[%s2 + $0x30] sm:$0xff]
        %v310 = vld [vmem:[%s2 + $0x38] sm:$0xff]
        %312 = vset.pattern.permute.xlu0 0
        %313 = vperm.xlu0 %312, %v303
        %v314 = vpop.permute.xlu0 %313
        %317 = vset.pattern.permute.xlu0 0
        %318 = vperm.xlu0 %317, %v304
        %v319 = vpop.permute.xlu0 %318
        %322 = vset.pattern.permute.xlu0 0
        %323 = vperm.xlu0 %322, %v305
        %v324 = vpop.permute.xlu0 %323
        %327 = vset.pattern.permute.xlu0 0
        %328 = vperm.xlu0 %327, %v306
        %v329 = vpop.permute.xlu0 %328
        %332 = vset.pattern.permute.xlu0 0
        %333 = vperm.xlu0 %332, %v307
        %v334 = vpop.permute.xlu0 %333
        %337 = vset.pattern.permute.xlu0 0
        %338 = vperm.xlu0 %337, %v308
        %v339 = vpop.permute.xlu0 %338
        %342 = vset.pattern.permute.xlu0 0
        %343 = vperm.xlu0 %342, %v309
        %v344 = vpop.permute.xlu0 %343
        %347 = vset.pattern.permute.xlu0 0
        %348 = vperm.xlu0 %347, %v310
        %v349 = vpop.permute.xlu0 %348
        %vm351 = vcmask 261120
        %v353 = vsel %vm351, %v295, 0
        %v356 = vsel %vm351, %v296, 0
        %v359 = vsel %vm351, %v297, 0
        %v362 = vsel %vm351, %v298, 0
        %v365 = vsel %vm351, %v299, 0
        %v368 = vsel %vm351, %v300, 0
        %v371 = vsel %vm351, %v301, 0
        %v374 = vsel %vm351, %v302, 0
        %v377 = vsel %vm351, %v279, 0
        %v380 = vsel %vm351, %v280, 0
        %v383 = vsel %vm351, %v281, 0
        %v386 = vsel %vm351, %v282, 0
        %v389 = vsel %vm351, %v283, 0
        %v392 = vsel %vm351, %v284, 0
        %v395 = vsel %vm351, %v285, 0
        %v398 = vsel %vm351, %v286, 0
        %v401 = vsel %vm351, %v287, 0
        %v404 = vsel %vm351, %v288, 0
        %v407 = vsel %vm351, %v289, 0
        %v410 = vsel %vm351, %v290, 0
        %v413 = vsel %vm351, %v291, 0
        %v416 = vsel %vm351, %v292, 0
        %v419 = vsel %vm351, %v293, 0
        %v422 = vsel %vm351, %v294, 0
        %424 = vmatprep.subr.mxu0 0.0
        %425 = vmatpush1.xpose.msra.mxu0 %v377
        %426 = vmatprep.subr.mxu0 0.0
        %427 = vmatpush1.xpose.msra.mxu0 %v380
        %428 = vmatprep.subr.mxu0 0.0
        %429 = vmatpush1.xpose.msra.mxu0 %v383
        %430 = vmatprep.subr.mxu0 0.0
        %431 = vmatpush1.xpose.msra.mxu0 %v386
        %432 = vmatprep.subr.mxu0 0.0
        %433 = vmatpush1.xpose.msra.mxu0 %v389
        %434 = vmatprep.subr.mxu0 0.0
        %435 = vmatpush1.xpose.msra.mxu0 %v392
        %436 = vmatprep.subr.mxu0 0.0
        %437 = vmatpush1.xpose.msra.mxu0 %v395
        %438 = vmatprep.subr.mxu0 0.0
        %439 = vmatpush1.xpose.msra.mxu0 %v398
        %440 = vmatprep.subr.mxu0 0.0
        %441 = vmatpush1.xpose.msra.mxu0 %v401
        %442 = vmatprep.subr.mxu0 0.0
        %443 = vmatpush1.xpose.msra.mxu0 %v404
        %444 = vmatprep.subr.mxu0 0.0
        %445 = vmatpush1.xpose.msra.mxu0 %v407
        %446 = vmatprep.subr.mxu0 0.0
        %447 = vmatpush1.xpose.msra.mxu0 %v410
        %448 = vmatprep.subr.mxu0 0.0
        %449 = vmatpush1.xpose.msra.mxu0 %v413
        %450 = vmatprep.subr.mxu0 0.0
        %451 = vmatpush1.xpose.msra.mxu0 %v416
        %452 = vmatprep.subr.mxu0 0.0
        %453 = vmatpush1.xpose.msra.mxu0 %v419
        %454 = vmatprep.subr.mxu0 0.0
        %455 = vmatpush1.xpose.msra.mxu0 %v422
        %456 = vmatprep.subr.mxu0 0.0
        %457 = vmatpush1.xpose.msra.mxu0 0.0
        %458 = vmatprep.subr.mxu0 0.0
        %459 = vmatpush1.xpose.msra.mxu0 0.0
        %460 = vmatprep.subr.mxu0 0.0
        %461 = vmatpush1.xpose.msra.mxu0 0.0
        %462 = vmatprep.subr.mxu0 0.0
        %463 = vmatpush1.xpose.msra.mxu0 0.0
        %464 = vmatprep.subr.mxu0 0.0
        %465 = vmatpush1.xpose.msra.mxu0 0.0
        %466 = vmatprep.subr.mxu0 0.0
        %467 = vmatpush1.xpose.msra.mxu0 0.0
        %468 = vmatprep.subr.mxu0 0.0
        %469 = vmatpush1.xpose.msra.mxu0 0.0
        %470 = vmatprep.subr.mxu0 0.0
        %471 = vmatpush1.xpose.msra.mxu0 0.0
        %472 = vmatprep.subr.mxu0 0.0
        %473 = vmatpush1.xpose.msra.mxu0 0.0
        %474 = vmatprep.subr.mxu0 0.0
        %475 = vmatpush1.xpose.msra.mxu0 0.0
        %476 = vmatprep.subr.mxu0 0.0
        %477 = vmatpush1.xpose.msra.mxu0 0.0
        %478 = vmatprep.subr.mxu0 0.0
        %479 = vmatpush1.xpose.msra.mxu0 0.0
        %480 = vmatprep.subr.mxu0 0.0
        %481 = vmatpush1.xpose.msra.mxu0 0.0
        %482 = vmatprep.subr.mxu0 0.0
        %483 = vmatpush1.xpose.msra.mxu0 0.0
        %484 = vmatprep.subr.mxu0 0.0
        %485 = vmatpush1.xpose.msra.mxu0 0.0
        %486 = vmatprep.subr.mxu0 0.0
        %487 = vmatpush1.xpose.msra.mxu0 0.0
        %488 = vmatprep.mubr.f32.mxu0 0.0
        %489 = vmatmul.mubr.f32.gmra.mrb[0].mxu0 %v353
        %v490 = vpop.f32.mrb[0].mxu0
        %v491 = vadd.f32 %v314, %v490
        %v492 = vpop.f32.mrb[0].mxu0
        %493 = vmatprep.mubr.f32.mxu0 0.0
        %494 = vmatmul.mubr.f32.gmra.mrb[0].mxu0 %v356
        %v495 = vpop.f32.mrb[0].mxu0
        %v496 = vadd.f32 %v319, %v495
        %v497 = vpop.f32.mrb[0].mxu0
        %498 = vmatprep.mubr.f32.mxu0 0.0
        %499 = vmatmul.mubr.f32.gmra.mrb[0].mxu0 %v359
        %v500 = vpop.f32.mrb[0].mxu0
        %v501 = vadd.f32 %v324, %v500
        %v502 = vpop.f32.mrb[0].mxu0
        %503 = vmatprep.mubr.f32.mxu0 0.0
        %504 = vmatmul.mubr.f32.gmra.mrb[0].mxu0 %v362
        %v505 = vpop.f32.mrb[0].mxu0
        %v506 = vadd.f32 %v329, %v505
        %v507 = vpop.f32.mrb[0].mxu0
        %508 = vmatprep.mubr.f32.mxu0 0.0
        %509 = vmatmul.mubr.f32.gmra.mrb[0].mxu0 %v365
        %v510 = vpop.f32.mrb[0].mxu0
        %v511 = vadd.f32 %v334, %v510
        %v512 = vpop.f32.mrb[0].mxu0
        %513 = vmatprep.mubr.f32.mxu0 0.0
        %514 = vmatmul.mubr.f32.gmra.mrb[0].mxu0 %v368
        %v515 = vpop.f32.mrb[0].mxu0
        %v516 = vadd.f32 %v339, %v515
        %v517 = vpop.f32.mrb[0].mxu0
        %518 = vmatprep.mubr.f32.mxu0 0.0
        %519 = vmatmul.mubr.f32.gmra.mrb[0].mxu0 %v371
        %v520 = vpop.f32.mrb[0].mxu0
        %v521 = vadd.f32 %v344, %v520
        %v522 = vpop.f32.mrb[0].mxu0
        %523 = vmatprep.mubr.f32.mxu0 0.0
        %524 = vmatmul.mubr.f32.gmra.mrb[0].mxu0 %v374
        %v525 = vpop.f32.mrb[0].mxu0
        %v526 = vadd.f32 %v349, %v525
        %v527 = vpop.f32.mrb[0].mxu0
        %528 = vdwg.mxu0
        %v529 = vmax.f32 %v491, 0.0
        %v530 = vmax.f32 %v496, 0.0
        %v531 = vmax.f32 %v501, 0.0
        %v532 = vmax.f32 %v506, 0.0
        %v533 = vmax.f32 %v511, 0.0
        %v534 = vmax.f32 %v516, 0.0
        %v535 = vmax.f32 %v521, 0.0
        %v536 = vmax.f32 %v526, 0.0
        %v537 = vld [vmem:[%s3] sm:$0xff]
        %v538 = vld [vmem:[%s3 + $0x8] sm:$0xff]
        %v539 = vld [vmem:[%s3 + $0x10] sm:$0xff]
        %v540 = vld [vmem:[%s3 + $0x18] sm:$0xff]
        %v541 = vld [vmem:[%s4] sm:$0xff]
        %v542 = vld [vmem:[%s4 + $0x8] sm:$0xff]
        %v543 = vld [vmem:[%s4 + $0x10] sm:$0xff]
        %v544 = vld [vmem:[%s4 + $0x18] sm:$0xff]
        %546 = vset.pattern.permute.xlu0 0
        %547 = vperm.xlu0 %546, %v541
        %v548 = vpop.permute.xlu0 %547
        %551 = vset.pattern.permute.xlu0 0
        %552 = vperm.xlu0 %551, %v542
        %v553 = vpop.permute.xlu0 %552
        %556 = vset.pattern.permute.xlu0 0
        %557 = vperm.xlu0 %556, %v543
        %v558 = vpop.permute.xlu0 %557
        %561 = vset.pattern.permute.xlu0 0
        %562 = vperm.xlu0 %561, %v544
        %v563 = vpop.permute.xlu0 %562
        %vm565 = vcmask 523264
        %v567 = vsel %vm565, %v537, 0
        %v570 = vsel %vm565, %v538, 0
        %v573 = vsel %vm565, %v539, 0
        %v576 = vsel %vm565, %v540, 0
        %578 = vmatprep.subr.mxu0 0.0
        %579 = vmatpush1.msra.mxu0 %v529
        %580 = vmatprep.subr.mxu0 0.0
        %581 = vmatpush1.msra.mxu0 %v530
        %582 = vmatprep.subr.mxu0 0.0
        %583 = vmatpush1.msra.mxu0 %v531
        %584 = vmatprep.subr.mxu0 0.0
        %585 = vmatpush1.msra.mxu0 %v532
        %586 = vmatprep.subr.mxu0 0.0
        %587 = vmatpush1.msra.mxu0 %v533
        %588 = vmatprep.subr.mxu0 0.0
        %589 = vmatpush1.msra.mxu0 %v534
        %590 = vmatprep.subr.mxu0 0.0
        %591 = vmatpush1.msra.mxu0 %v535
        %592 = vmatprep.subr.mxu0 0.0
        %593 = vmatpush1.msra.mxu0 %v536
        %594 = vmatprep.subr.mxu0 0.0
        %595 = vmatpush1.msra.mxu0 0.0
        %596 = vmatprep.subr.mxu0 0.0
        %597 = vmatpush1.msra.mxu0 0.0
        %598 = vmatprep.subr.mxu0 0.0
        %599 = vmatpush1.msra.mxu0 0.0
        %600 = vmatprep.subr.mxu0 0.0
        %601 = vmatpush1.msra.mxu0 0.0
        %602 = vmatprep.subr.mxu0 0.0
        %603 = vmatpush1.msra.mxu0 0.0
        %604 = vmatprep.subr.mxu0 0.0
        %605 = vmatpush1.msra.mxu0 0.0
        %606 = vmatprep.subr.mxu0 0.0
        %607 = vmatpush1.msra.mxu0 0.0
        %608 = vmatprep.subr.mxu0 0.0
        %609 = vmatpush1.msra.mxu0 0.0
        %610 = vmatprep.subr.mxu0 0.0
        %611 = vmatpush1.msra.mxu0 0.0
        %612 = vmatprep.subr.mxu0 0.0
        %613 = vmatpush1.msra.mxu0 0.0
        %614 = vmatprep.subr.mxu0 0.0
        %615 = vmatpush1.msra.mxu0 0.0
        %616 = vmatprep.subr.mxu0 0.0
        %617 = vmatpush1.msra.mxu0 0.0
        %618 = vmatprep.subr.mxu0 0.0
        %619 = vmatpush1.msra.mxu0 0.0
        %620 = vmatprep.subr.mxu0 0.0
        %621 = vmatpush1.msra.mxu0 0.0
        %622 = vmatprep.subr.mxu0 0.0
        %623 = vmatpush1.msra.mxu0 0.0
        %624 = vmatprep.subr.mxu0 0.0
        %625 = vmatpush1.msra.mxu0 0.0
        %626 = vmatprep.subr.mxu0 0.0
        %627 = vmatpush1.msra.mxu0 0.0
        %628 = vmatprep.subr.mxu0 0.0
        %629 = vmatpush1.msra.mxu0 0.0
        %630 = vmatprep.subr.mxu0 0.0
        %631 = vmatpush1.msra.mxu0 0.0
        %632 = vmatprep.subr.mxu0 0.0
        %633 = vmatpush1.msra.mxu0 0.0
        %634 = vmatprep.subr.mxu0 0.0
        %635 = vmatpush1.msra.mxu0 0.0
        %636 = vmatprep.subr.mxu0 0.0
        %637 = vmatpush1.msra.mxu0 0.0
        %638 = vmatprep.subr.mxu0 0.0
        %639 = vmatpush1.msra.mxu0 0.0
        %640 = vmatprep.subr.mxu0 0.0
        %641 = vmatpush1.msra.mxu0 0.0
        %642 = vmatprep.mubr.f32.mxu0 0.0
        %643 = vmatmul.mubr.f32.gmra.mrb[0].mxu0 %v567
        %v644 = vpop.f32.mrb[0].mxu0
        %v645 = vadd.f32 %v548, %v644
        %v646 = vpop.f32.mrb[0].mxu0
        %647 = vmatprep.mubr.f32.mxu0 0.0
        %648 = vmatmul.mubr.f32.gmra.mrb[0].mxu0 %v570
        %v649 = vpop.f32.mrb[0].mxu0
        %v650 = vadd.f32 %v553, %v649
        %v651 = vpop.f32.mrb[0].mxu0
        %652 = vmatprep.mubr.f32.mxu0 0.0
        %653 = vmatmul.mubr.f32.gmra.mrb[0].mxu0 %v573
        %v654 = vpop.f32.mrb[0].mxu0
        %v655 = vadd.f32 %v558, %v654
        %v656 = vpop.f32.mrb[0].mxu0
        %657 = vmatprep.mubr.f32.mxu0 0.0
        %658 = vmatmul.mubr.f32.gmra.mrb[0].mxu0 %v576
        %v659 = vpop.f32.mrb[0].mxu0
        %v660 = vadd.f32 %v563, %v659
        %v661 = vpop.f32.mrb[0].mxu0
        %662 = vdwg.mxu0
        %v663 = vmax.f32 %v645, 0.0
        %v664 = vmax.f32 %v650, 0.0
        %v665 = vmax.f32 %v655, 0.0
        %v666 = vmax.f32 %v660, 0.0
        %v667 = vld [vmem:[%s5] sm:$0xff]
        %v668 = vld [vmem:[%s5 + $0x8] sm:$0xff]
        %v669 = vld [vmem:[%s6] sm:$0xff]
        %v670 = vld [vmem:[%s6 + $0x8] sm:$0xff]
        %672 = vset.pattern.permute.xlu0 0
        %673 = vperm.xlu0 %672, %v669
        %v674 = vpop.permute.xlu0 %673
        %677 = vset.pattern.permute.xlu0 0
        %678 = vperm.xlu0 %677, %v670
        %v679 = vpop.permute.xlu0 %678
        %v682 = vsel %vm351, %v667, 0
        %v685 = vsel %vm351, %v668, 0
        %687 = vmatprep.subr.mxu0 0.0
        %688 = vmatpush1.msra.mxu0 %v663
        %689 = vmatprep.subr.mxu0 0.0
        %690 = vmatpush1.msra.mxu0 %v664
        %691 = vmatprep.subr.mxu0 0.0
        %692 = vmatpush1.msra.mxu0 %v665
        %693 = vmatprep.subr.mxu0 0.0
        %694 = vmatpush1.msra.mxu0 %v666
        %695 = vmatprep.subr.mxu0 0.0
        %696 = vmatpush1.msra.mxu0 0.0
        %697 = vmatprep.subr.mxu0 0.0
        %698 = vmatpush1.msra.mxu0 0.0
        %699 = vmatprep.subr.mxu0 0.0
        %700 = vmatpush1.msra.mxu0 0.0
        %701 = vmatprep.subr.mxu0 0.0
        %702 = vmatpush1.msra.mxu0 0.0
        %703 = vmatprep.subr.mxu0 0.0
        %704 = vmatpush1.msra.mxu0 0.0
        %705 = vmatprep.subr.mxu0 0.0
        %706 = vmatpush1.msra.mxu0 0.0
        %707 = vmatprep.subr.mxu0 0.0
        %708 = vmatpush1.msra.mxu0 0.0
        %709 = vmatprep.subr.mxu0 0.0
        %710 = vmatpush1.msra.mxu0 0.0
        %711 = vmatprep.subr.mxu0 0.0
        %712 = vmatpush1.msra.mxu0 0.0
        %713 = vmatprep.subr.mxu0 0.0
        %714 = vmatpush1.msra.mxu0 0.0
        %715 = vmatprep.subr.mxu0 0.0
        %716 = vmatpush1.msra.mxu0 0.0
        %717 = vmatprep.subr.mxu0 0.0
        %718 = vmatpush1.msra.mxu0 0.0
        %719 = vmatprep.subr.mxu0 0.0
        %720 = vmatpush1.msra.mxu0 0.0
        %721 = vmatprep.subr.mxu0 0.0
        %722 = vmatpush1.msra.mxu0 0.0
        %723 = vmatprep.subr.mxu0 0.0
        %724 = vmatpush1.msra.mxu0 0.0
        %725 = vmatprep.subr.mxu0 0.0
        %726 = vmatpush1.msra.mxu0 0.0
        %727 = vmatprep.subr.mxu0 0.0
        %728 = vmatpush1.msra.mxu0 0.0
        %729 = vmatprep.subr.mxu0 0.0
        %730 = vmatpush1.msra.mxu0 0.0
        %731 = vmatprep.subr.mxu0 0.0
        %732 = vmatpush1.msra.mxu0 0.0
        %733 = vmatprep.subr.mxu0 0.0
        %734 = vmatpush1.msra.mxu0 0.0
        %735 = vmatprep.subr.mxu0 0.0
        %736 = vmatpush1.msra.mxu0 0.0
        %737 = vmatprep.subr.mxu0 0.0
        %738 = vmatpush1.msra.mxu0 0.0
        %739 = vmatprep.subr.mxu0 0.0
        %740 = vmatpush1.msra.mxu0 0.0
        %741 = vmatprep.subr.mxu0 0.0
        %742 = vmatpush1.msra.mxu0 0.0
        %743 = vmatprep.subr.mxu0 0.0
        %744 = vmatpush1.msra.mxu0 0.0
        %745 = vmatprep.subr.mxu0 0.0
        %746 = vmatpush1.msra.mxu0 0.0
        %747 = vmatprep.subr.mxu0 0.0
        %748 = vmatpush1.msra.mxu0 0.0
        %749 = vmatprep.subr.mxu0 0.0
        %750 = vmatpush1.msra.mxu0 0.0
        %751 = vmatprep.mubr.f32.mxu0 0.0
        %752 = vmatmul.mubr.f32.gmra.mrb[0].mxu0 %v682
        %v753 = vpop.f32.mrb[0].mxu0
        %v754 = vadd.f32 %v674, %v753
        %v755 = vpop.f32.mrb[0].mxu0
        %756 = vmatprep.mubr.f32.mxu0 0.0
        %757 = vmatmul.mubr.f32.gmra.mrb[0].mxu0 %v685
        %v758 = vpop.f32.mrb[0].mxu0
        %v759 = vadd.f32 %v679, %v758
        %v760 = vpop.f32.mrb[0].mxu0
        %761 = vdwg.mxu0
        %v762 = vtanh.pop %v754
        %v763 = vtanh.pop %v759
        %764 = vst [vmem:[%s272] sm:$0xff] %v762
        %765 = vst [vmem:[%s272 + $0x8] sm:$0xff] %v763
        %s766 = sand.u32 %s181, 1
        %s767 = scalar_lea.sflag [#allocation3], %s766
        %s768 = sand.u32 %s181, 1
        %s769 = smul.addr %s768, 16
        %s770 = scalar_lea.vmem [#allocation2], %s769
        // Predicated region
        $region49: #{tpu_custom_call.1} parent=47 // pred_check
          %p771 = pneg %p191
        $region50: #{tpu_custom_call.1} parent=47 // pred_check_branch
          %773 = sbr.rel (%p771) target = $region52
        $region51: #{tpu_custom_call.1} parent=47 // pred_region
          %s775 = ssub.s32 256, 256
          %776 = vsyncadd %s767, %s775
          %s777 = smul.addr %s21, 128
          %s778 = scalar_lea.hbm %s7, %s777
          %s779 = sshll.u32 %s770, 4
          %s780 = int_to_ptr.vmem [resolvable:$true] %s779
          %785 = dma.vmem_to_hbm [thread:$0]  %s780, 256, %s778, %s767, 128, 256, 8
        $region52: #{tpu_custom_call.1} parent=47 // pred_fallthru
          _
      $region48: #{tpu_custom_call.1} parent=5 // pred_fallthru
        _
      %p786 = scmp.le.s32.totalorder 2, %s16
      // Predicated region
      $region53: #{tpu_custom_call.1} parent=5 // pred_check
        %p787 = pneg %p786
      $region54: #{tpu_custom_call.1} parent=5 // pred_check_branch
        %789 = sbr.rel (%p787) target = $region56
      $region55: #{tpu_custom_call.1} parent=5 // pred_region
        %s790 = ssub.s32 %s16, 2
        // Predicated region
        $region57: #{tpu_custom_call.1} parent=55 // pred_check
          %p791 = pneg %p197
        $region58: #{tpu_custom_call.1} parent=55 // pred_check_branch
          %793 = sbr.rel (%p791) target = $region60
        $region59: #{tpu_custom_call.1} parent=55 // pred_region
          %s794 = sand.u32 %s182, 1
          %s795 = scalar_lea.sflag [#allocation3], %s794
          %s796 = sand.u32 %s182, 1
          %s797 = smul.addr %s796, 16
          %s798 = scalar_lea.vmem [#allocation2], %s797
          %799 = dma.done %s795, 256
        $region60: #{tpu_custom_call.1} parent=55 // pred_fallthru
          _
      $region56: #{tpu_custom_call.1} parent=5 // pred_fallthru
        _
    $region6: #{tpu_custom_call.1} parent=1 // loop_footer
      %s20 = sadd.s32 1, %s16
    $region7: #{tpu_custom_call.1} parent=1 // loop_footer_branch
      %15 = sbr.rel target = $region3
    $region8: #{tpu_custom_call.1} parent=1 // loop_exit
      _
    %800 = vsyncpa [#allocation3], 1
    %s801 = scalar_lea.sflag [#allocation3], 1
    %802 = vsyncpa %s801, 1

</llo_original>
